<compile_context>
chip_gen: v6e
topology: v6e:2x2x1
jax: 0.10.0
libtpu: 0.0.40
codegen_flags: <defaults>
</compile_context>

<pallas_src>
import jax
import jax.numpy as jnp
from jax.experimental import pallas as pl
from jax.experimental.pallas import tpu as pltpu


def _actor_kernel(x_ref, w1_ref, b1_ref, w2_ref, b2_ref, w3_ref, b3_ref, o_ref):
    # x tile: (TB, S) f32; weights: bf16 (in, out); biases: (1, out) f32.
    x = x_ref[...].astype(jnp.bfloat16)

    h1 = jnp.dot(x, w1_ref[...], preferred_element_type=jnp.float32) + b1_ref[...]
    h1 = jnp.maximum(h1, 0.0)                                  # relu (f32 VPU)

    h2 = jnp.dot(h1.astype(jnp.bfloat16), w2_ref[...],
                 preferred_element_type=jnp.float32) + b2_ref[...]
    h2 = jnp.maximum(h2, 0.0)                                  # relu (f32 VPU)

    h3 = jnp.dot(h2.astype(jnp.bfloat16), w3_ref[...],
                 preferred_element_type=jnp.float32) + b3_ref[...]
    o_ref[...] = jnp.tanh(h3).astype(o_ref.dtype)              # tanh output (f32)


def _round_up(x, m):
    return ((x + m - 1) // m) * m


def actor_forward(state, params, *, tile_b=512):
    """Fused 3-layer MLP actor forward pass, batch-tiled over a 1-D grid.

    state : (B, state_dim) float32
    params: dict with w1 (S,H0), b1 (1,H0), w2 (H0,H1), b2 (1,H1),
            w3 (H1,A), b3 (1,A) — all float32 (weights are cast to bf16 here).
    """
    B, S = state.shape
    H0 = params["w1"].shape[1]
    H1 = params["w2"].shape[1]
    A = params["w3"].shape[1]

    # Batch tile: multiple of 8 (sublane), capped at tile_b; pad B up to a multiple.
    TB = min(tile_b, _round_up(B, 8))
    Bp = _round_up(B, TB)
    if Bp != B:
        state = jnp.pad(state, ((0, Bp - B), (0, 0)))

    # bf16 weights: halves MXU work + DMA bytes; f32 accumulation keeps accuracy.
    w1 = params["w1"].astype(jnp.bfloat16)
    w2 = params["w2"].astype(jnp.bfloat16)
    w3 = params["w3"].astype(jnp.bfloat16)
    b1, b2, b3 = params["b1"], params["b2"], params["b3"]      # stay f32

    flops = 2 * Bp * (S * H0 + H0 * H1 + H1 * A)
    bytes_accessed = (Bp * S * 4 + Bp * A * 4
                      + (w1.size + w2.size + w3.size) * 2
                      + (b1.size + b2.size + b3.size) * 4)

    out = pl.pallas_call(
        _actor_kernel,
        out_shape=jax.ShapeDtypeStruct((Bp, A), jnp.float32),
        grid=(Bp // TB,),
        in_specs=[
            # Activations: a new (TB, S) tile per grid step (double-buffered).
            pl.BlockSpec((TB, S), lambda i: (i, 0)),
            # Weights / biases: constant block index -> resident in VMEM.
            pl.BlockSpec((S, H0), lambda i: (0, 0)),
            pl.BlockSpec((1, H0), lambda i: (0, 0)),
            pl.BlockSpec((H0, H1), lambda i: (0, 0)),
            pl.BlockSpec((1, H1), lambda i: (0, 0)),
            pl.BlockSpec((H1, A), lambda i: (0, 0)),
            pl.BlockSpec((1, A), lambda i: (0, 0)),
        ],
        out_specs=pl.BlockSpec((TB, A), lambda i: (i, 0)),
        compiler_params=pltpu.CompilerParams(
            dimension_semantics=("parallel",)),      # 2-TC sharding on v7x
        cost_estimate=pl.CostEstimate(
            flops=int(flops),
            transcendentals=int(Bp * A),
            bytes_accessed=int(bytes_accessed)),
    )(state, w1, b1, w2, b2, w3, b3)

    return out[:B]


def init_actor_params(key, state_dim, action_dim, net_dim):
    """Deterministic init mimicking nn.Linear's U(-1/sqrt(fan_in), 1/sqrt(fan_in))."""
    dims = [state_dim, net_dim[0], net_dim[1], action_dim]
    params = {}
    for i in range(3):
        fan_in, fan_out = dims[i], dims[i + 1]
        key, kw, kb = jax.random.split(key, 3)
        bound = 1.0 / jnp.sqrt(jnp.float32(fan_in))
        params[f"w{i+1}"] = jax.random.uniform(
            kw, (fan_in, fan_out), jnp.float32, -bound, bound)
        params[f"b{i+1}"] = jax.random.uniform(
            kb, (1, fan_out), jnp.float32, -bound, bound)
    return params


def _reference_forward(state, params):
    h1 = jnp.maximum(state @ params["w1"] + params["b1"], 0.0)
    h2 = jnp.maximum(h1 @ params["w2"] + params["b2"], 0.0)
    return jnp.tanh(h2 @ params["w3"] + params["b3"])


if __name__ == "__main__":
    # Small shapes consistent with the module: batch=2, state_dim=16,
    # net_dim=(32, 32), action_dim=8.
    batch, state_dim, action_dim = 2, 16, 8
    net_dim = (32, 32)

    key = jax.random.PRNGKey(0)
    key, k_state = jax.random.split(key)
    state = jax.random.normal(k_state, (batch, state_dim), jnp.float32)

    params = init_actor_params(key, state_dim, action_dim, net_dim)

    out = actor_forward(state, params)
    out = jax.block_until_ready(out)

    ref = _reference_forward(state, params)
    assert out.shape == (batch, action_dim)
    # bf16 matmul inputs (f32 accumulate) -> relaxed tolerance vs pure-f32 reference.
    assert jnp.allclose(out, ref, atol=3e-2, rtol=3e-2)

    # TODO(synk): optimizer (Adam) / update() is training-side state and has no
    # forward-pass Pallas equivalent; only forward is implemented.
    print("KERNEL_OK")
</pallas_src>

<mosaic_0001>
module attributes {stable_mosaic.version = 11 : i64} {
  func.func @_actor_kernel(%arg0: i32, %arg1: memref<8x16xf32, #tpu.memory_space<vmem>>, %arg2: memref<16x32xbf16, #tpu.memory_space<vmem>>, %arg3: memref<1x32xf32, #tpu.memory_space<vmem>>, %arg4: memref<32x32xbf16, #tpu.memory_space<vmem>>, %arg5: memref<1x32xf32, #tpu.memory_space<vmem>>, %arg6: memref<32x8xbf16, #tpu.memory_space<vmem>>, %arg7: memref<1x8xf32, #tpu.memory_space<vmem>>, %arg8: memref<8x8xf32, #tpu.memory_space<vmem>>) attributes {dimension_semantics = [#tpu.dimension_semantics<parallel>], iteration_bounds = array<i64: 1>, scalar_prefetch = 0 : i64, scratch_operands = 0 : i64, tpu.core_type = #tpu.core_type<tc>, window_params = [{transform_indices = @transform_0, window_bounds = array<i64: 8, 16>}, {pipeline_mode = #tpu.pipeline_mode<synchronous>, transform_indices = @transform_1, window_bounds = array<i64: 16, 32>}, {pipeline_mode = #tpu.pipeline_mode<synchronous>, transform_indices = @transform_2, window_bounds = array<i64: 1, 32>}, {pipeline_mode = #tpu.pipeline_mode<synchronous>, transform_indices = @transform_3, window_bounds = array<i64: 32, 32>}, {pipeline_mode = #tpu.pipeline_mode<synchronous>, transform_indices = @transform_4, window_bounds = array<i64: 1, 32>}, {pipeline_mode = #tpu.pipeline_mode<synchronous>, transform_indices = @transform_5, window_bounds = array<i64: 32, 8>}, {pipeline_mode = #tpu.pipeline_mode<synchronous>, transform_indices = @transform_6, window_bounds = array<i64: 1, 8>}, {transform_indices = @transform_7, window_bounds = array<i64: 8, 8>}]} {
    %c0 = arith.constant 0 : index
    %c0_0 = arith.constant 0 : index
    %0 = vector.load %arg1[%c0, %c0_0] : memref<8x16xf32, #tpu.memory_space<vmem>>, vector<8x16xf32>
    %1 = arith.truncf %0 : vector<8x16xf32> to vector<8x16xbf16>
    %c0_1 = arith.constant 0 : index
    %c0_2 = arith.constant 0 : index
    %2 = vector.load %arg2[%c0_1, %c0_2] : memref<16x32xbf16, #tpu.memory_space<vmem>>, vector<16x32xbf16>
    %cst = arith.constant dense<0.000000e+00> : vector<8x32xf32>
    %3 = tpu.matmul %1, %2, %cst {dimension_numbers = #tpu.dot_dimension_numbers<[1], [0], [0], [1], [0, 0, 1, 1], [], []>} : vector<8x16xbf16>, vector<16x32xbf16>, vector<8x32xf32> -> vector<8x32xf32>
    %c0_3 = arith.constant 0 : index
    %c0_4 = arith.constant 0 : index
    %4 = vector.load %arg3[%c0_3, %c0_4] : memref<1x32xf32, #tpu.memory_space<vmem>>, vector<1x32xf32>
    %5 = vector.broadcast %4 : vector<1x32xf32> to vector<8x32xf32>
    %6 = arith.addf %3, %5 : vector<8x32xf32>
    %cst_5 = arith.constant 0.000000e+00 : f32
    %7 = vector.broadcast %cst_5 : f32 to vector<8x32xf32>
    %8 = arith.maximumf %6, %7 : vector<8x32xf32>
    %9 = arith.truncf %8 : vector<8x32xf32> to vector<8x32xbf16>
    %c0_6 = arith.constant 0 : index
    %c0_7 = arith.constant 0 : index
    %10 = vector.load %arg4[%c0_6, %c0_7] : memref<32x32xbf16, #tpu.memory_space<vmem>>, vector<32x32xbf16>
    %cst_8 = arith.constant dense<0.000000e+00> : vector<8x32xf32>
    %11 = tpu.matmul %9, %10, %cst_8 {dimension_numbers = #tpu.dot_dimension_numbers<[1], [0], [0], [1], [0, 0, 1, 1], [], []>} : vector<8x32xbf16>, vector<32x32xbf16>, vector<8x32xf32> -> vector<8x32xf32>
    %c0_9 = arith.constant 0 : index
    %c0_10 = arith.constant 0 : index
    %12 = vector.load %arg5[%c0_9, %c0_10] : memref<1x32xf32, #tpu.memory_space<vmem>>, vector<1x32xf32>
    %13 = vector.broadcast %12 : vector<1x32xf32> to vector<8x32xf32>
    %14 = arith.addf %11, %13 : vector<8x32xf32>
    %cst_11 = arith.constant 0.000000e+00 : f32
    %15 = vector.broadcast %cst_11 : f32 to vector<8x32xf32>
    %16 = arith.maximumf %14, %15 : vector<8x32xf32>
    %17 = arith.truncf %16 : vector<8x32xf32> to vector<8x32xbf16>
    %c0_12 = arith.constant 0 : index
    %c0_13 = arith.constant 0 : index
    %18 = vector.load %arg6[%c0_12, %c0_13] : memref<32x8xbf16, #tpu.memory_space<vmem>>, vector<32x8xbf16>
    %cst_14 = arith.constant dense<0.000000e+00> : vector<8x8xf32>
    %19 = tpu.matmul %17, %18, %cst_14 {dimension_numbers = #tpu.dot_dimension_numbers<[1], [0], [0], [1], [0, 0, 1, 1], [], []>} : vector<8x32xbf16>, vector<32x8xbf16>, vector<8x8xf32> -> vector<8x8xf32>
    %c0_15 = arith.constant 0 : index
    %c0_16 = arith.constant 0 : index
    %20 = vector.load %arg7[%c0_15, %c0_16] : memref<1x8xf32, #tpu.memory_space<vmem>>, vector<1x8xf32>
    %21 = vector.broadcast %20 : vector<1x8xf32> to vector<8x8xf32>
    %22 = arith.addf %19, %21 : vector<8x8xf32>
    %23 = math.tanh %22 : vector<8x8xf32>
    %c0_17 = arith.constant 0 : index
    %c0_18 = arith.constant 0 : index
    %24 = vector.load %arg8[%c0_17, %c0_18] : memref<8x8xf32, #tpu.memory_space<vmem>>, vector<8x8xf32>
    tpu.vector_store %arg8[%c0_17, %c0_18], %23 {strides = array<i32>} : memref<8x8xf32, #tpu.memory_space<vmem>>, vector<8x8xf32>,
    return
  }
  func.func @transform_0(%arg0: i32) -> (i32, i32) {
    %c0_i32 = arith.constant 0 : i32
    %c0_i32_0 = arith.constant 0 : i32
    return %arg0, %c0_i32 : i32, i32
  }
  func.func @transform_1(%arg0: i32) -> (i32, i32) {
    %c0_i32 = arith.constant 0 : i32
    %c0_i32_0 = arith.constant 0 : i32
    %c0_i32_1 = arith.constant 0 : i32
    return %c0_i32, %c0_i32_0 : i32, i32
  }
  func.func @transform_2(%arg0: i32) -> (i32, i32) {
    %c0_i32 = arith.constant 0 : i32
    %c0_i32_0 = arith.constant 0 : i32
    %c0_i32_1 = arith.constant 0 : i32
    return %c0_i32, %c0_i32_0 : i32, i32
  }
  func.func @transform_3(%arg0: i32) -> (i32, i32) {
    %c0_i32 = arith.constant 0 : i32
    %c0_i32_0 = arith.constant 0 : i32
    %c0_i32_1 = arith.constant 0 : i32
    return %c0_i32, %c0_i32_0 : i32, i32
  }
  func.func @transform_4(%arg0: i32) -> (i32, i32) {
    %c0_i32 = arith.constant 0 : i32
    %c0_i32_0 = arith.constant 0 : i32
    %c0_i32_1 = arith.constant 0 : i32
    return %c0_i32, %c0_i32_0 : i32, i32
  }
  func.func @transform_5(%arg0: i32) -> (i32, i32) {
    %c0_i32 = arith.constant 0 : i32
    %c0_i32_0 = arith.constant 0 : i32
    %c0_i32_1 = arith.constant 0 : i32
    return %c0_i32, %c0_i32_0 : i32, i32
  }
  func.func @transform_6(%arg0: i32) -> (i32, i32) {
    %c0_i32 = arith.constant 0 : i32
    %c0_i32_0 = arith.constant 0 : i32
    %c0_i32_1 = arith.constant 0 : i32
    return %c0_i32, %c0_i32_0 : i32, i32
  }
  func.func @transform_7(%arg0: i32) -> (i32, i32) {
    %c0_i32 = arith.constant 0 : i32
    %c0_i32_0 = arith.constant 0 : i32
    return %arg0, %c0_i32 : i32, i32
  }
}

</mosaic_0001>

<llo_original>
// kernel: tpu_custom_call.1
$region0: #{tpu_custom_call.1}
  #allocation0 [shape = 'u32[]', space=smem, size = 0x4, offset = 0x4, fixed_abs, tag = 'smem constant byte address 0x4 - core index']
  #allocation1 [shape = 'u32[144,128]{1,0:T(1,128)}', space=vmem, size = 0x12000, scoped, tag = 'internal scratch']
  %s0 = inlined_call_operand.vmem [shape: f32[8,16], index: 0, kind: input, shape index: {}]
  %s1 = inlined_call_operand.hbm [shape: bf16[16,32], index: 1, kind: input, shape index: {}]
  %s2 = inlined_call_operand.vmem [shape: f32[1,32], index: 2, kind: input, shape index: {}]
  %s3 = inlined_call_operand.vmem [shape: bf16[32,32], index: 3, kind: input, shape index: {}]
  %s4 = inlined_call_operand.hbm [shape: f32[1,32], index: 4, kind: input, shape index: {}]
  %s5 = inlined_call_operand.vmem [shape: bf16[32,8], index: 5, kind: input, shape index: {}]
  %s6 = inlined_call_operand.vmem [shape: f32[1,8], index: 6, kind: input, shape index: {}]
  %s7 = inlined_call_operand.hbm [shape: f32[8,8], index: 7, kind: output, shape index: {}]
  %s8 = sld [smem:[#allocation0]]
  $region46: #{tpu_custom_call.1} parent=0
    _
  %s10 = ssub.s32 1, %s8
  %s11 = scalar_select 0, %s10, %s8
  $region1: #{tpu_custom_call.1} parent=0
    #allocation2 [shape = 'u8[4096]{0}', space=vmem, size = 0x1000, scoped, tag = 'input window, operand 1, single buffered']
    #allocation3 [shape = 's32[1]{0}', space=sflag, size = 0x4, scoped, tag = 'scoped memory for tpu_custom_call.1']
    #allocation4 [shape = 's32[1]{0}', space=sflag, size = 0x4, scoped, tag = 'scoped memory for tpu_custom_call.1']
    #allocation5 [shape = 'u8[512]{0}', space=vmem, size = 0x400, scoped, tag = 'input window, operand 4, single buffered']
    #allocation6 [shape = 's32[1]{0}', space=sflag, size = 0x4, scoped, tag = 'scoped memory for tpu_custom_call.1']
    #allocation7 [shape = 'u8[4096]{0}', space=vmem, size = 0x1000, scoped, tag = 'output window, operand 0, single buffered']
    %12 = vsyncpa [#allocation3], 0
    %13 = vsyncpa [#allocation6], 0
    %14 = vsyncpa [#allocation4], 0
    // Predicated region
    $region2: #{tpu_custom_call.1} parent=1 // pred_check
      _
    $region3: #{tpu_custom_call.1} parent=1 // pred_check_branch
      %16 = sbr.rel (0) target = $region5
    $region4: #{tpu_custom_call.1} parent=1 // pred_region
      _
    $region5: #{tpu_custom_call.1} parent=1 // pred_fallthru
      _
    // Predicated region
    $region6: #{tpu_custom_call.1} parent=1 // pred_check
      _
    $region7: #{tpu_custom_call.1} parent=1 // pred_check_branch
      %18 = sbr.rel (0) target = $region9
    $region8: #{tpu_custom_call.1} parent=1 // pred_region
      %s20 = ssub.s32 128, 128
      %21 = vsyncadd [#allocation3], %s20
      %s22 = sshll.u32 [#allocation2], 4
      %s23 = int_to_ptr.vmem [resolvable:$true] %s22
      %28 = dma.hbm_to_vmem [thread:$0]  %s1, 128, %s23, [#allocation3], 64, 64, 4
    $region9: #{tpu_custom_call.1} parent=1 // pred_fallthru
      _
    // Predicated region
    $region10: #{tpu_custom_call.1} parent=1 // pred_check
      _
    $region11: #{tpu_custom_call.1} parent=1 // pred_check_branch
      %30 = sbr.rel (0) target = $region13
    $region12: #{tpu_custom_call.1} parent=1 // pred_region
      _
    $region13: #{tpu_custom_call.1} parent=1 // pred_fallthru
      _
    // Predicated region
    $region14: #{tpu_custom_call.1} parent=1 // pred_check
      _
    $region15: #{tpu_custom_call.1} parent=1 // pred_check_branch
      %32 = sbr.rel (0) target = $region17
    $region16: #{tpu_custom_call.1} parent=1 // pred_region
      _
    $region17: #{tpu_custom_call.1} parent=1 // pred_fallthru
      _
    // Predicated region
    $region18: #{tpu_custom_call.1} parent=1 // pred_check
      _
    $region19: #{tpu_custom_call.1} parent=1 // pred_check_branch
      %34 = sbr.rel (0) target = $region21
    $region20: #{tpu_custom_call.1} parent=1 // pred_region
      %s36 = ssub.s32 16, 16
      %37 = vsyncadd [#allocation6], %s36
      %s39 = sshll.u32 [#allocation5], 4
      %s40 = int_to_ptr.vmem [resolvable:$true] %s39
      %42 = dma.hbm_to_vmem [thread:$0]  %s4, 16, %s40, [#allocation6]
    $region21: #{tpu_custom_call.1} parent=1 // pred_fallthru
      _
    // Predicated region
    $region22: #{tpu_custom_call.1} parent=1 // pred_check
      _
    $region23: #{tpu_custom_call.1} parent=1 // pred_check_branch
      %44 = sbr.rel (0) target = $region25
    $region24: #{tpu_custom_call.1} parent=1 // pred_region
      _
    $region25: #{tpu_custom_call.1} parent=1 // pred_fallthru
      _
    // Predicated region
    $region26: #{tpu_custom_call.1} parent=1 // pred_check
      _
    $region27: #{tpu_custom_call.1} parent=1 // pred_check_branch
      %46 = sbr.rel (0) target = $region29
    $region28: #{tpu_custom_call.1} parent=1 // pred_region
      _
    $region29: #{tpu_custom_call.1} parent=1 // pred_fallthru
      _
    // Predicated region
    $region30: #{tpu_custom_call.1} parent=1 // pred_check
      _
    $region31: #{tpu_custom_call.1} parent=1 // pred_check_branch
      %48 = sbr.rel (0) target = $region33
    $region32: #{tpu_custom_call.1} parent=1 // pred_region
      %49 = dma.done [#allocation3], 128
    $region33: #{tpu_custom_call.1} parent=1 // pred_fallthru
      _
    // Predicated region
    $region34: #{tpu_custom_call.1} parent=1 // pred_check
      _
    $region35: #{tpu_custom_call.1} parent=1 // pred_check_branch
      %51 = sbr.rel (0) target = $region37
    $region36: #{tpu_custom_call.1} parent=1 // pred_region
      %52 = dma.done [#allocation6], 16
    $region37: #{tpu_custom_call.1} parent=1 // pred_fallthru
      _
    %v54 = vld [vmem:[%s0] sm:$0xff]
    %v55 = vpack.c.bf16 %v54, %v54
    %v56 = vld [vmem:[#allocation2] sm:$0xf]
    %v57 = vld [vmem:[#allocation2 + $0x4] sm:$0xf]
    %v58 = vld [vmem:[%s2] sm:$0x1]
    %v60 = vlaneseq
    %v61 = vshrl.u32 %v60, 7
    %v62 = vsub.s32 0, %v61
    %v63 = vrot.slane %v58, %v62
    %v67 = vunpack.c.l.b16 %v56
    %v68 = vunpack.c.l.b16 %v57
    %v69 = vpack.c.b16 %v68, %v67
    %vm71 = vcmask 130048
    %v73 = vsel %vm71, %v55, 0
    %75 = vmatprep.subr.bf16.mxu0 0
    %76 = vmatpush1.bf16.msra.mxu0 0
    %77 = vmatprep.subr.bf16.mxu0 0
    %78 = vmatpush1.bf16.msra.mxu0 0
    %79 = vmatprep.subr.bf16.mxu0 0
    %80 = vmatpush1.bf16.msra.mxu0 0
    %81 = vmatprep.subr.bf16.mxu0 0
    %82 = vmatpush1.bf16.msra.mxu0 0
    %83 = vmatprep.subr.bf16.mxu0 0
    %84 = vmatpush1.bf16.msra.mxu0 0
    %85 = vmatprep.subr.bf16.mxu0 0
    %86 = vmatpush1.bf16.msra.mxu0 0
    %87 = vmatprep.subr.bf16.mxu0 0
    %88 = vmatpush1.bf16.msra.mxu0 0
    %89 = vmatprep.subr.bf16.mxu0 0
    %90 = vmatpush1.bf16.msra.mxu0 %v69
    %91 = vmatprep.subr.bf16.mxu0 0
    %92 = vmatpush2.bf16.msra.mxu0 0
    %93 = vmatprep.subr.bf16.mxu0 0
    %94 = vmatpush2.bf16.msra.mxu0 0
    %95 = vmatprep.subr.bf16.mxu0 0
    %96 = vmatpush2.bf16.msra.mxu0 0
    %97 = vmatprep.subr.bf16.mxu0 0
    %98 = vmatpush2.bf16.msra.mxu0 0
    %99 = vmatprep.subr.bf16.mxu0 0
    %100 = vmatpush2.bf16.msra.mxu0 0
    %101 = vmatprep.subr.bf16.mxu0 0
    %102 = vmatpush2.bf16.msra.mxu0 0
    %103 = vmatprep.subr.bf16.mxu0 0
    %104 = vmatpush2.bf16.msra.mxu0 0
    %105 = vmatprep.subr.bf16.mxu0 0
    %106 = vmatpush2.bf16.msra.mxu0 0
    %107 = vmatprep.mubr.bf16.mxu0 0
    %108 = vmatmul.mubr.bf16.gmra.mxu0 %v73
    %v109 = vpop.f32.mrf.mxu0
    %v110 = vadd.f32 %v63, %v109
    %v111 = vpop.f32.mrf.mxu0
    %v112 = vpop.f32.mrf.mxu0
    %v113 = vpop.f32.mrf.mxu0
    %114 = vdwg.mxu0
    %v115 = vmax.f32 %v110, 0.0
    %v116 = vpack.c.bf16 %v115, %v115
    %v117 = vld [vmem:[%s3] sm:$0xf]
    %v118 = vld [vmem:[%s3 + $0x4] sm:$0xf]
    %v119 = vld [vmem:[%s3 + $0x8] sm:$0xf]
    %v120 = vld [vmem:[%s3 + $0xc] sm:$0xf]
    %v121 = vld [vmem:[#allocation5] sm:$0x1]
    %v123 = vlaneseq
    %v124 = vshrl.u32 %v123, 7
    %v125 = vsub.s32 0, %v124
    %v126 = vrot.slane %v121, %v125
    %v132 = vunpack.c.l.b16 %v117
    %v133 = vunpack.c.l.b16 %v118
    %v134 = vunpack.c.l.b16 %v119
    %v135 = vunpack.c.l.b16 %v120
    %v136 = vpack.c.b16 %v133, %v132
    %v137 = vpack.c.b16 %v135, %v134
    %vm140 = vcmask 261120
    %v142 = vsel %vm140, %v116, 0
    %144 = vmatprep.subr.bf16.mxu0 0
    %145 = vmatpush1.bf16.msra.mxu0 0
    %146 = vmatprep.subr.bf16.mxu0 0
    %147 = vmatpush1.bf16.msra.mxu0 0
    %148 = vmatprep.subr.bf16.mxu0 0
    %149 = vmatpush1.bf16.msra.mxu0 0
    %150 = vmatprep.subr.bf16.mxu0 0
    %151 = vmatpush1.bf16.msra.mxu0 0
    %152 = vmatprep.subr.bf16.mxu0 0
    %153 = vmatpush1.bf16.msra.mxu0 0
    %154 = vmatprep.subr.bf16.mxu0 0
    %155 = vmatpush1.bf16.msra.mxu0 0
    %156 = vmatprep.subr.bf16.mxu0 0
    %157 = vmatpush1.bf16.msra.mxu0 %v137
    %158 = vmatprep.subr.bf16.mxu0 0
    %159 = vmatpush1.bf16.msra.mxu0 %v136
    %160 = vmatprep.subr.bf16.mxu0 0
    %161 = vmatpush2.bf16.msra.mxu0 0
    %162 = vmatprep.subr.bf16.mxu0 0
    %163 = vmatpush2.bf16.msra.mxu0 0
    %164 = vmatprep.subr.bf16.mxu0 0
    %165 = vmatpush2.bf16.msra.mxu0 0
    %166 = vmatprep.subr.bf16.mxu0 0
    %167 = vmatpush2.bf16.msra.mxu0 0
    %168 = vmatprep.subr.bf16.mxu0 0
    %169 = vmatpush2.bf16.msra.mxu0 0
    %170 = vmatprep.subr.bf16.mxu0 0
    %171 = vmatpush2.bf16.msra.mxu0 0
    %172 = vmatprep.subr.bf16.mxu0 0
    %173 = vmatpush2.bf16.msra.mxu0 0
    %174 = vmatprep.subr.bf16.mxu0 0
    %175 = vmatpush2.bf16.msra.mxu0 0
    %176 = vmatprep.mubr.bf16.mxu0 0
    %177 = vmatmul.mubr.bf16.gmra.mxu0 %v142
    %v178 = vpop.f32.mrf.mxu0
    %v179 = vadd.f32 %v126, %v178
    %v180 = vpop.f32.mrf.mxu0
    %v181 = vpop.f32.mrf.mxu0
    %v182 = vpop.f32.mrf.mxu0
    %183 = vdwg.mxu0
    %v184 = vmax.f32 %v179, 0.0
    %v185 = vpack.c.bf16 %v184, %v184
    %v186 = vld [vmem:[%s5] sm:$0xf]
    %v187 = vld [vmem:[%s5 + $0x4] sm:$0xf]
    %v188 = vld [vmem:[%s5 + $0x8] sm:$0xf]
    %v189 = vld [vmem:[%s5 + $0xc] sm:$0xf]
    %v190 = vld [vmem:[%s6] sm:$0x1]
    %v192 = vlaneseq
    %v193 = vshrl.u32 %v192, 7
    %v194 = vsub.s32 0, %v193
    %v195 = vrot.slane %v190, %v194
    %v201 = vunpack.c.l.b16 %v186
    %v202 = vunpack.c.l.b16 %v187
    %v203 = vunpack.c.l.b16 %v188
    %v204 = vunpack.c.l.b16 %v189
    %v205 = vpack.c.b16 %v202, %v201
    %v206 = vpack.c.b16 %v204, %v203
    %v210 = vsel %vm140, %v185, 0
    %212 = vmatprep.subr.bf16.mxu0 0
    %213 = vmatpush1.bf16.msra.mxu0 0
    %214 = vmatprep.subr.bf16.mxu0 0
    %215 = vmatpush1.bf16.msra.mxu0 0
    %216 = vmatprep.subr.bf16.mxu0 0
    %217 = vmatpush1.bf16.msra.mxu0 0
    %218 = vmatprep.subr.bf16.mxu0 0
    %219 = vmatpush1.bf16.msra.mxu0 0
    %220 = vmatprep.subr.bf16.mxu0 0
    %221 = vmatpush1.bf16.msra.mxu0 0
    %222 = vmatprep.subr.bf16.mxu0 0
    %223 = vmatpush1.bf16.msra.mxu0 0
    %224 = vmatprep.subr.bf16.mxu0 0
    %225 = vmatpush1.bf16.msra.mxu0 %v206
    %226 = vmatprep.subr.bf16.mxu0 0
    %227 = vmatpush1.bf16.msra.mxu0 %v205
    %228 = vmatprep.subr.bf16.mxu0 0
    %229 = vmatpush2.bf16.msra.mxu0 0
    %230 = vmatprep.subr.bf16.mxu0 0
    %231 = vmatpush2.bf16.msra.mxu0 0
    %232 = vmatprep.subr.bf16.mxu0 0
    %233 = vmatpush2.bf16.msra.mxu0 0
    %234 = vmatprep.subr.bf16.mxu0 0
    %235 = vmatpush2.bf16.msra.mxu0 0
    %236 = vmatprep.subr.bf16.mxu0 0
    %237 = vmatpush2.bf16.msra.mxu0 0
    %238 = vmatprep.subr.bf16.mxu0 0
    %239 = vmatpush2.bf16.msra.mxu0 0
    %240 = vmatprep.subr.bf16.mxu0 0
    %241 = vmatpush2.bf16.msra.mxu0 0
    %242 = vmatprep.subr.bf16.mxu0 0
    %243 = vmatpush2.bf16.msra.mxu0 0
    %244 = vmatprep.mubr.bf16.mxu0 0
    %245 = vmatmul.mubr.bf16.gmra.mxu0 %v210
    %v246 = vpop.f32.mrf.mxu0
    %v247 = vadd.f32 %v195, %v246
    %v248 = vpop.f32.mrf.mxu0
    %v249 = vpop.f32.mrf.mxu0
    %v250 = vpop.f32.mrf.mxu0
    %251 = vdwg.mxu0
    %v252 = vtanh.pop %v247
    %vm253 = vcmask 64512
    %254 = vst.msk [vmem:[#allocation7] sm:$0xff] %vm253, %v252
    // Predicated region
    $region38: #{tpu_custom_call.1} parent=1 // pred_check
      _
    $region39: #{tpu_custom_call.1} parent=1 // pred_check_branch
      %256 = sbr.rel (0) target = $region41
    $region40: #{tpu_custom_call.1} parent=1 // pred_region
      %s258 = ssub.s32 128, 128
      %259 = vsyncadd [#allocation4], %s258
      %s261 = sshll.u32 [#allocation7], 4
      %s262 = int_to_ptr.vmem [resolvable:$true] %s261
      %264 = dma.vmem_to_hbm [thread:$0]  %s262, 128, %s7, [#allocation4]
    $region41: #{tpu_custom_call.1} parent=1 // pred_fallthru
      _
    // Predicated region
    $region42: #{tpu_custom_call.1} parent=1 // pred_check
      _
    $region43: #{tpu_custom_call.1} parent=1 // pred_check_branch
      %266 = sbr.rel (0) target = $region45
    $region44: #{tpu_custom_call.1} parent=1 // pred_region
      %267 = dma.done [#allocation4], 128
    $region45: #{tpu_custom_call.1} parent=1 // pred_fallthru
      _
    %268 = vsyncpa [#allocation3], 1
    %269 = vsyncpa [#allocation6], 1
    %270 = vsyncpa [#allocation4], 1

</llo_original>
